<compile_context>
chip_gen: v6e
topology: v6e:2x2x1
jax: 0.10.0
libtpu: 0.0.40
codegen_flags: <defaults>
</compile_context>

<pallas_src>
import jax
import jax.numpy as jnp
from jax.experimental import pallas as pl
from jax.experimental.pallas import tpu as pltpu


def _identity_kernel(x_ref, o_ref):
    # Elementwise copy of one lane-dense (TR, L) tile through VMEM.
    o_ref[...] = x_ref[...]


def _round_up(x, m):
    return (x + m - 1) // m * m


def _choose_row_tile(rows, cols, itemsize):
    """Pick a row-tile TR (multiple of 8, divisor of `rows`) with block <= ~4 MiB.

    4 MiB per block keeps double-buffered in + out (~4x block bytes) comfortably
    inside v7x's 32 MiB default-scoped / 64 MiB physical VMEM, while staying in the
    512-2048-row regime that hits ~85% of HBM roofline for mem-bound elementwise ops.
    """
    max_block_bytes = 4 * 1024 * 1024
    max_rows = max(8, (max_block_bytes // max(1, cols * itemsize)) // 8 * 8)
    tr = min(rows, max_rows, 2048)
    tr = max(8, (tr // 8) * 8)
    # rows is pre-padded to a multiple of 8, so this terminates at tr >= 8 and
    # guarantees every grid step writes a full, unmasked tile.
    while rows % tr != 0:
        tr -= 8
    return tr


def encoder_decoder_forward(x_nchw):
    """Pallas 'forward' for the EncoderDecoder stub.

    Args:
      x_nchw: f32[B, C, H, W] input batch (NCHW, matching PyTorch convention).

    Returns:
      (y, ref_result): `y` is the identity pass-through computed by the Pallas
      kernel (same shape/dtype as the input); `ref_result` is None, matching the
      reference module's forward() which returns nothing.
    """
    B, C, H, W = x_nchw.shape

    # Lane-dense 2-D slab: sublane axis = B*C, lane axis = H*W.
    rows, cols = B * C, H * W
    x2d = x_nchw.reshape(rows, cols)

    # Pad (only if needed) so tiling honours the (8, 128) constraint with
    # dense, unmasked stores. For the default shapes below this is a no-op.
    rows_p = _round_up(rows, 8)
    cols_p = _round_up(cols, 128)
    if (rows_p, cols_p) != (rows, cols):
        x2d = jnp.pad(x2d, ((0, rows_p - rows), (0, cols_p - cols)))

    tr = _choose_row_tile(rows_p, cols_p, x2d.dtype.itemsize)
    grid = (rows_p // tr,)

    y2d = pl.pallas_call(
        _identity_kernel,
        out_shape=jax.ShapeDtypeStruct((rows_p, cols_p), x2d.dtype),
        grid=grid,
        in_specs=[pl.BlockSpec((tr, cols_p), lambda i: (i, 0))],
        out_specs=pl.BlockSpec((tr, cols_p), lambda i: (i, 0)),
        # Identity copy: alias input buffer to output so the HBM round-trip can
        # be elided when the input is donatable.
        input_output_aliases={0: 0},
        compiler_params=pltpu.CompilerParams(
            dimension_semantics=("parallel",),
        ),
    )(x2d)

    y = y2d[:rows, :cols].reshape(B, C, H, W)
    # The reference module's forward returns None; surface that alongside the
    # kernel's pass-through result.
    return y, None


if __name__ == "__main__":
    key = jax.random.PRNGKey(0)
    # Small shapes consistent with a generic (input_size, hidden_size) encoder-
    # decoder stub: batch=2, channels=4, spatial=16x16.
    x = jax.random.normal(key, (2, 4, 16, 16), dtype=jnp.float32)

    y, ref_result = encoder_decoder_forward(x)
    y = jax.block_until_ready(y)

    # Sanity: kernel is an identity pass-through; reference forward returns None.
    assert ref_result is None
    assert y.shape == x.shape and y.dtype == x.dtype
    assert bool(jnp.allclose(y, x))

    print("KERNEL_OK")
</pallas_src>

<mosaic_0001>
module attributes {stable_mosaic.version = 11 : i64} {
  func.func @_identity_kernel(%arg0: i32, %arg1: memref<8x256xf32, #tpu.memory_space<vmem>>, %arg2: memref<8x256xf32, #tpu.memory_space<vmem>>) attributes {dimension_semantics = [#tpu.dimension_semantics<parallel>], iteration_bounds = array<i64: 1>, scalar_prefetch = 0 : i64, scratch_operands = 0 : i64, tpu.core_type = #tpu.core_type<tc>, window_params = [{transform_indices = @transform_0, window_bounds = array<i64: 8, 256>}, {transform_indices = @transform_1, window_bounds = array<i64: 8, 256>}]} {
    %c0 = arith.constant 0 : index
    %c0_0 = arith.constant 0 : index
    %0 = vector.load %arg1[%c0, %c0_0] : memref<8x256xf32, #tpu.memory_space<vmem>>, vector<8x256xf32>
    %c0_1 = arith.constant 0 : index
    %c0_2 = arith.constant 0 : index
    %1 = vector.load %arg2[%c0_1, %c0_2] : memref<8x256xf32, #tpu.memory_space<vmem>>, vector<8x256xf32>
    tpu.vector_store %arg2[%c0_1, %c0_2], %0 {strides = array<i32>} : memref<8x256xf32, #tpu.memory_space<vmem>>, vector<8x256xf32>,
    return
  }
  func.func @transform_0(%arg0: i32) -> (i32, i32) {
    %c0_i32 = arith.constant 0 : i32
    %c0_i32_0 = arith.constant 0 : i32
    return %arg0, %c0_i32 : i32, i32
  }
  func.func @transform_1(%arg0: i32) -> (i32, i32) {
    %c0_i32 = arith.constant 0 : i32
    %c0_i32_0 = arith.constant 0 : i32
    return %arg0, %c0_i32 : i32, i32
  }
}

</mosaic_0001>

<llo_original>
// kernel: tpu_custom_call.1
$region0: #{tpu_custom_call.1}
  #allocation0 [shape = 'u32[]', space=smem, size = 0x4, offset = 0x4, fixed_abs, tag = 'smem constant byte address 0x4 - core index']
  #allocation1 [shape = 'u32[144,128]{1,0:T(1,128)}', space=vmem, size = 0x12000, scoped, tag = 'internal scratch']
  %s0 = inlined_call_operand.hbm [shape: f32[8,256], index: 0, kind: input, shape index: {}, may-alias: {0,1}]
  %s1 = inlined_call_operand.hbm [shape: f32[8,256], index: 1, kind: output, shape index: {}, may-alias: {0,1}]
  %s2 = sld [smem:[#allocation0]]
  $region18: #{tpu_custom_call.1} parent=0
    _
  %s4 = ssub.s32 1, %s2
  %s5 = scalar_select 0, %s4, %s2
  $region1: #{tpu_custom_call.1} parent=0
    #allocation2 [shape = 'u8[8192]{0}', space=vmem, size = 0x2000, scoped, tag = 'input window, operand 0, single buffered']
    #allocation3 [shape = 's32[1]{0}', space=sflag, size = 0x4, scoped, tag = 'scoped memory for tpu_custom_call.1']
    #allocation4 [shape = 's32[1]{0}', space=sflag, size = 0x4, scoped, tag = 'scoped memory for tpu_custom_call.1']
    #allocation5 [shape = 'u8[8192]{0}', space=vmem, size = 0x2000, scoped, tag = 'output window, operand 0, single buffered']
    %6 = vsyncpa [#allocation3], 0
    %7 = vsyncpa [#allocation4], 0
    // Predicated region
    $region2: #{tpu_custom_call.1} parent=1 // pred_check
      _
    $region3: #{tpu_custom_call.1} parent=1 // pred_check_branch
      %9 = sbr.rel (0) target = $region5
    $region4: #{tpu_custom_call.1} parent=1 // pred_region
      %s11 = ssub.s32 256, 256
      %12 = vsyncadd [#allocation3], %s11
      %s14 = sshll.u32 [#allocation2], 4
      %s15 = int_to_ptr.vmem [resolvable:$true] %s14
      %17 = dma.hbm_to_vmem [thread:$0]  %s0, 256, %s15, [#allocation3]
    $region5: #{tpu_custom_call.1} parent=1 // pred_fallthru
      _
    // Predicated region
    $region6: #{tpu_custom_call.1} parent=1 // pred_check
      _
    $region7: #{tpu_custom_call.1} parent=1 // pred_check_branch
      %19 = sbr.rel (0) target = $region9
    $region8: #{tpu_custom_call.1} parent=1 // pred_region
      %20 = dma.done [#allocation3], 256
    $region9: #{tpu_custom_call.1} parent=1 // pred_fallthru
      _
    %v21 = vld [vmem:[#allocation2] sm:$0xff]
    %v22 = vld [vmem:[#allocation2 + $0x8] sm:$0xff]
    %23 = vst [vmem:[#allocation5] sm:$0xff] %v21
    %24 = vst [vmem:[#allocation5 + $0x8] sm:$0xff] %v22
    // Predicated region
    $region10: #{tpu_custom_call.1} parent=1 // pred_check
      _
    $region11: #{tpu_custom_call.1} parent=1 // pred_check_branch
      %26 = sbr.rel (0) target = $region13
    $region12: #{tpu_custom_call.1} parent=1 // pred_region
      %s28 = ssub.s32 256, 256
      %29 = vsyncadd [#allocation4], %s28
      %s31 = sshll.u32 [#allocation5], 4
      %s32 = int_to_ptr.vmem [resolvable:$true] %s31
      %34 = dma.vmem_to_hbm [thread:$0]  %s32, 256, %s1, [#allocation4]
    $region13: #{tpu_custom_call.1} parent=1 // pred_fallthru
      _
    // Predicated region
    $region14: #{tpu_custom_call.1} parent=1 // pred_check
      _
    $region15: #{tpu_custom_call.1} parent=1 // pred_check_branch
      %36 = sbr.rel (0) target = $region17
    $region16: #{tpu_custom_call.1} parent=1 // pred_region
      %37 = dma.done [#allocation4], 256
    $region17: #{tpu_custom_call.1} parent=1 // pred_fallthru
      _
    %38 = vsyncpa [#allocation3], 1
    %39 = vsyncpa [#allocation4], 1

</llo_original>
